<compile_context>
chip_gen: v5e
topology: v5e:2x2
jax: 0.10.0
libtpu: 0.0.40
codegen_flags: <defaults>
</compile_context>

<pallas_src>
import math
import numpy as np
import jax
import jax.numpy as jnp
from jax.experimental import pallas as pl
from jax.experimental.pallas import tpu as pltpu

NEG_BIG = -1e30  # finite stand-in for masked_fill_(-inf); identical softmax
                 # result whenever >=1 position per sequence is unmasked.


# ------------------------------- Pallas kernel -------------------------------

def time_encoder_kernel(t_ref, q_ref, m_ref, w1_ref, b1_ref, w2t_ref, b2_ref,
                        out_ref):
    # Block shapes: t (TB,S), q (TB,S,D), m (TB,S) int8; weights full/resident.
    TB, S = t_ref.shape
    D = w2t_ref.shape[0]

    t = t_ref[...] * (1.0 / 180.0)                              # (TB, S)
    # selection_layer: Linear(1, D)  ==  broadcasted outer product + bias
    x = t[:, :, None] * w1_ref[...] + b1_ref[...]               # (TB, S, D)
    sf = 1.0 - jnp.tanh(x * x)                                  # EUP tanh
    # weight_layer: Linear(D, D) + ReLU -- one (TB*S, D) @ (D, D) MXU push
    h = jnp.dot(sf.reshape(TB * S, D), w2t_ref[...],
                preferred_element_type=jnp.float32) + b2_ref[...]
    h = jnp.maximum(h, 0.0).reshape(TB, S, D)
    # per-position score, then masked softmax over the sequence (lane) axis
    scores = jnp.sum(h * q_ref[...], axis=-1) * 0.125           # (TB, S)
    masked = m_ref[...].astype(jnp.float32)                     # 1.0 == masked
    scores = jnp.where(masked != 0.0, NEG_BIG, scores)
    smax = jnp.max(scores, axis=-1, keepdims=True)              # (TB, 1)
    p = jnp.exp(scores - smax)
    denom = jnp.sum(p, axis=-1, keepdims=True)                  # (TB, 1)
    out_ref[...] = p / denom                                    # dense store


# ------------------------------ pallas wrapper ------------------------------

@jax.jit
def _time_encoder_jit(params, seq_time_step, final_queries, mask):
    B, S = seq_time_step.shape
    D = params["w2_t"].shape[0]

    # Fold the whole (small) batch into one grid step; tile by 8 sequences per
    # step when the batch is production-sized.
    TB = 8 if (B % 8 == 0) else B
    nsteps = B // TB

    t = seq_time_step.astype(jnp.float32)                 # (B, S)  lane-dense
    q = final_queries.astype(jnp.float32)                 # (B, S, D)
    m = mask.reshape(B, S).astype(jnp.int8)               # (B, S)  1 == masked

    act_bs = pl.BlockSpec((TB, S), lambda i: (i, 0))
    act_bsd = pl.BlockSpec((TB, S, D), lambda i: (i, 0, 0))
    vec = pl.BlockSpec((1, D), lambda i: (0, 0))
    mat = pl.BlockSpec((D, D), lambda i: (0, 0))

    out = pl.pallas_call(
        time_encoder_kernel,
        out_shape=jax.ShapeDtypeStruct((B, S), jnp.float32),
        grid=(nsteps,),
        in_specs=[act_bs, act_bsd, act_bs, vec, vec, mat, vec],
        out_specs=act_bs,
        compiler_params=pltpu.CompilerParams(
            dimension_semantics=("parallel",) if nsteps > 1 else ("arbitrary",)),
    )(t, q, m, params["w1"], params["b1"], params["w2_t"], params["b2"])

    # PyTorch returns (B, S, 1); do the lane-sparse reshape outside the kernel.
    return out.reshape(B, S, 1)


def time_encoder_forward(params, seq_time_step, final_queries, options, mask):
    # `options` only carries the use_gpu flag in PyTorch (device placement);
    # JAX handles placement, so it is accepted for API fidelity and ignored.
    del options
    return _time_encoder_jit(params, seq_time_step, final_queries, mask)


# -------------------------------- parameters --------------------------------

def make_params(key, D=64):
    k1, k2, k3, k4 = jax.random.split(key, 4)
    # selection_layer: nn.Linear(1, D) -> weight (D,1), bias (D,); fan_in = 1
    w1 = jax.random.uniform(k1, (D,), jnp.float32, -1.0, 1.0)
    b1 = jax.random.uniform(k2, (D,), jnp.float32, -1.0, 1.0)
    # weight_layer: nn.Linear(D, D); fan_in = D
    bound = 1.0 / math.sqrt(D)
    w2 = jax.random.uniform(k3, (D, D), jnp.float32, -bound, bound)
    b2 = jax.random.uniform(k4, (D,), jnp.float32, -bound, bound)
    return dict(
        w1=w1.reshape(1, D),   # (1, D)  == selection_layer.weight.T
        b1=b1.reshape(1, D),
        w2_t=w2.T,             # (D_in, D_out) so kernel does x @ w2_t
        b2=b2.reshape(1, D),
    )


# ---------------------------- pure-JAX reference ----------------------------

def reference_forward(params, seq_time_step, final_queries, mask):
    t = (seq_time_step.astype(jnp.float32) / 180.0)[..., None]      # (B,S,1)
    x = t * params["w1"] + params["b1"]                              # (B,S,D)
    sf = 1.0 - jnp.tanh(x ** 2)
    h = jax.nn.relu(sf @ params["w2_t"] + params["b2"])
    scores = jnp.sum(h * final_queries, axis=2, keepdims=True) / 8.0
    scores = jnp.where(mask, -jnp.inf, scores)                       # faithful
    return jax.nn.softmax(scores, axis=1)


# ------------------------------------ main ------------------------------------

if __name__ == "__main__":
    B, S, D = 2, 8, 64      # batch, visits (seq), hidden (forced by Linear(1,64))

    key = jax.random.PRNGKey(0)
    kp, kt, kq = jax.random.split(key, 3)
    params = make_params(kp, D)

    seq_time_step = jax.random.uniform(kt, (B, S), jnp.float32, 0.0, 360.0)
    final_queries = jax.random.normal(kq, (B, S, D), jnp.float32)
    lens = jnp.array([8, 5], dtype=jnp.int32)
    # padding mask: True == masked (each sequence keeps >=1 valid position)
    mask = (jnp.arange(S)[None, :] >= lens[:, None])[..., None]      # (B,S,1)
    options = {"use_gpu": False}

    out = time_encoder_forward(params, seq_time_step, final_queries, options, mask)
    out = jax.block_until_ready(out)

    ref = reference_forward(params, seq_time_step, final_queries, mask)
    assert out.shape == (B, S, 1)
    np.testing.assert_allclose(np.asarray(out), np.asarray(ref),
                               atol=1e-4, rtol=1e-4)
    # probabilities over the (unmasked) sequence positions sum to 1
    np.testing.assert_allclose(np.asarray(out.sum(axis=1)), 1.0, atol=1e-5)
    print("KERNEL_OK")
</pallas_src>

<mosaic_0001>
module attributes {stable_mosaic.version = 11 : i64} {
  func.func @time_encoder_kernel(%arg0: i32, %arg1: memref<2x8xf32, #tpu.memory_space<vmem>>, %arg2: memref<2x8x64xf32, #tpu.memory_space<vmem>>, %arg3: memref<2x8xi8, #tpu.memory_space<vmem>>, %arg4: memref<1x64xf32, #tpu.memory_space<vmem>>, %arg5: memref<1x64xf32, #tpu.memory_space<vmem>>, %arg6: memref<64x64xf32, #tpu.memory_space<vmem>>, %arg7: memref<1x64xf32, #tpu.memory_space<vmem>>, %arg8: memref<2x8xf32, #tpu.memory_space<vmem>>) attributes {dimension_semantics = [#tpu.dimension_semantics<arbitrary>], iteration_bounds = array<i64: 1>, scalar_prefetch = 0 : i64, scratch_operands = 0 : i64, tpu.core_type = #tpu.core_type<tc>, window_params = [{transform_indices = @transform_0, window_bounds = array<i64: 2, 8>}, {transform_indices = @transform_1, window_bounds = array<i64: 2, 8, 64>}, {transform_indices = @transform_2, window_bounds = array<i64: 2, 8>}, {pipeline_mode = #tpu.pipeline_mode<synchronous>, transform_indices = @transform_3, window_bounds = array<i64: 1, 64>}, {pipeline_mode = #tpu.pipeline_mode<synchronous>, transform_indices = @transform_4, window_bounds = array<i64: 1, 64>}, {pipeline_mode = #tpu.pipeline_mode<synchronous>, transform_indices = @transform_5, window_bounds = array<i64: 64, 64>}, {pipeline_mode = #tpu.pipeline_mode<synchronous>, transform_indices = @transform_6, window_bounds = array<i64: 1, 64>}, {transform_indices = @transform_7, window_bounds = array<i64: 2, 8>}]} {
    %c0 = arith.constant 0 : index
    %c0_0 = arith.constant 0 : index
    %0 = vector.load %arg1[%c0, %c0_0] : memref<2x8xf32, #tpu.memory_space<vmem>>, vector<2x8xf32>
    %cst = arith.constant 0.00555555569 : f32
    %1 = vector.broadcast %cst : f32 to vector<2x8xf32>
    %2 = arith.mulf %0, %1 : vector<2x8xf32>
    %3 = vector.shape_cast %2 : vector<2x8xf32> to vector<2x8x1xf32>
    %c0_1 = arith.constant 0 : index
    %c0_2 = arith.constant 0 : index
    %4 = vector.load %arg4[%c0_1, %c0_2] : memref<1x64xf32, #tpu.memory_space<vmem>>, vector<1x64xf32>
    %5 = vector.shape_cast %4 : vector<1x64xf32> to vector<1x1x64xf32>
    %6 = vector.broadcast %3 : vector<2x8x1xf32> to vector<2x8x64xf32>
    %7 = vector.broadcast %5 : vector<1x1x64xf32> to vector<2x8x64xf32>
    %8 = arith.mulf %6, %7 : vector<2x8x64xf32>
    %c0_3 = arith.constant 0 : index
    %c0_4 = arith.constant 0 : index
    %9 = vector.load %arg5[%c0_3, %c0_4] : memref<1x64xf32, #tpu.memory_space<vmem>>, vector<1x64xf32>
    %10 = vector.shape_cast %9 : vector<1x64xf32> to vector<1x1x64xf32>
    %11 = vector.broadcast %10 : vector<1x1x64xf32> to vector<2x8x64xf32>
    %12 = arith.addf %8, %11 : vector<2x8x64xf32>
    %13 = arith.mulf %12, %12 : vector<2x8x64xf32>
    %14 = math.tanh %13 : vector<2x8x64xf32>
    %cst_5 = arith.constant 1.000000e+00 : f32
    %15 = vector.broadcast %cst_5 : f32 to vector<2x8x64xf32>
    %16 = arith.subf %15, %14 : vector<2x8x64xf32>
    %17 = vector.shape_cast %16 : vector<2x8x64xf32> to vector<16x64xf32>
    %c0_6 = arith.constant 0 : index
    %c0_7 = arith.constant 0 : index
    %18 = vector.load %arg6[%c0_6, %c0_7] : memref<64x64xf32, #tpu.memory_space<vmem>>, vector<64x64xf32>
    %cst_8 = arith.constant dense<0.000000e+00> : vector<16x64xf32>
    %19 = tpu.matmul %17, %18, %cst_8 {dimension_numbers = #tpu.dot_dimension_numbers<[1], [0], [0], [1], [0, 0, 1, 1], [], []>} : vector<16x64xf32>, vector<64x64xf32>, vector<16x64xf32> -> vector<16x64xf32>
    %c0_9 = arith.constant 0 : index
    %c0_10 = arith.constant 0 : index
    %20 = vector.load %arg7[%c0_9, %c0_10] : memref<1x64xf32, #tpu.memory_space<vmem>>, vector<1x64xf32>
    %21 = vector.broadcast %20 : vector<1x64xf32> to vector<16x64xf32>
    %22 = arith.addf %19, %21 : vector<16x64xf32>
    %cst_11 = arith.constant 0.000000e+00 : f32
    %23 = vector.broadcast %cst_11 : f32 to vector<16x64xf32>
    %24 = arith.maximumf %22, %23 : vector<16x64xf32>
    %25 = vector.shape_cast %24 : vector<16x64xf32> to vector<2x8x64xf32>
    %c0_12 = arith.constant 0 : index
    %c0_13 = arith.constant 0 : index
    %c0_14 = arith.constant 0 : index
    %26 = vector.load %arg2[%c0_12, %c0_13, %c0_14] : memref<2x8x64xf32, #tpu.memory_space<vmem>>, vector<2x8x64xf32>
    %27 = arith.mulf %25, %26 : vector<2x8x64xf32>
    %cst_15 = arith.constant dense<0.000000e+00> : vector<2x8xf32>
    %28 = vector.multi_reduction <add>, %27, %cst_15 [2] : vector<2x8x64xf32> to vector<2x8xf32>
    %cst_16 = arith.constant 1.250000e-01 : f32
    %29 = vector.broadcast %cst_16 : f32 to vector<2x8xf32>
    %30 = arith.mulf %28, %29 : vector<2x8xf32>
    %c0_17 = arith.constant 0 : index
    %c0_18 = arith.constant 0 : index
    %31 = vector.load %arg3[%c0_17, %c0_18] : memref<2x8xi8, #tpu.memory_space<vmem>>, vector<2x8xi8>
    %32 = arith.sitofp %31 : vector<2x8xi8> to vector<2x8xf32>
    %cst_19 = arith.constant 0.000000e+00 : f32
    %33 = vector.broadcast %cst_19 : f32 to vector<2x8xf32>
    %34 = arith.cmpf one, %32, %33 : vector<2x8xf32>
    %cst_20 = arith.constant -1.000000e+30 : f32
    %35 = vector.broadcast %cst_20 : f32 to vector<2x8xf32>
    %36 = arith.select %34, %35, %30 : vector<2x8xi1>, vector<2x8xf32>
    %cst_21 = arith.constant dense<0xFF800000> : vector<2xf32>
    %37 = vector.multi_reduction <maximumf>, %36, %cst_21 [1] : vector<2x8xf32> to vector<2xf32>
    %38 = vector.shape_cast %37 : vector<2xf32> to vector<2x1xf32>
    %39 = vector.broadcast %38 : vector<2x1xf32> to vector<2x8xf32>
    %40 = arith.subf %36, %39 : vector<2x8xf32>
    %41 = math.exp %40 : vector<2x8xf32>
    %cst_22 = arith.constant dense<0.000000e+00> : vector<2xf32>
    %42 = vector.multi_reduction <add>, %41, %cst_22 [1] : vector<2x8xf32> to vector<2xf32>
    %43 = vector.shape_cast %42 : vector<2xf32> to vector<2x1xf32>
    %44 = vector.broadcast %43 : vector<2x1xf32> to vector<2x8xf32>
    %45 = arith.divf %41, %44 : vector<2x8xf32>
    %c0_23 = arith.constant 0 : index
    %c0_24 = arith.constant 0 : index
    %46 = vector.load %arg8[%c0_23, %c0_24] : memref<2x8xf32, #tpu.memory_space<vmem>>, vector<2x8xf32>
    tpu.vector_store %arg8[%c0_23, %c0_24], %45 {strides = array<i32>} : memref<2x8xf32, #tpu.memory_space<vmem>>, vector<2x8xf32>,
    return
  }
  func.func @transform_0(%arg0: i32) -> (i32, i32) {
    %c0_i32 = arith.constant 0 : i32
    %c0_i32_0 = arith.constant 0 : i32
    return %arg0, %c0_i32 : i32, i32
  }
  func.func @transform_1(%arg0: i32) -> (i32, i32, i32) {
    %c0_i32 = arith.constant 0 : i32
    %c0_i32_0 = arith.constant 0 : i32
    %c0_i32_1 = arith.constant 0 : i32
    return %arg0, %c0_i32, %c0_i32_0 : i32, i32, i32
  }
  func.func @transform_2(%arg0: i32) -> (i32, i32) {
    %c0_i32 = arith.constant 0 : i32
    %c0_i32_0 = arith.constant 0 : i32
    return %arg0, %c0_i32 : i32, i32
  }
  func.func @transform_3(%arg0: i32) -> (i32, i32) {
    %c0_i32 = arith.constant 0 : i32
    %c0_i32_0 = arith.constant 0 : i32
    %c0_i32_1 = arith.constant 0 : i32
    return %c0_i32, %c0_i32_0 : i32, i32
  }
  func.func @transform_4(%arg0: i32) -> (i32, i32) {
    %c0_i32 = arith.constant 0 : i32
    %c0_i32_0 = arith.constant 0 : i32
    %c0_i32_1 = arith.constant 0 : i32
    return %c0_i32, %c0_i32_0 : i32, i32
  }
  func.func @transform_5(%arg0: i32) -> (i32, i32) {
    %c0_i32 = arith.constant 0 : i32
    %c0_i32_0 = arith.constant 0 : i32
    %c0_i32_1 = arith.constant 0 : i32
    return %c0_i32, %c0_i32_0 : i32, i32
  }
  func.func @transform_6(%arg0: i32) -> (i32, i32) {
    %c0_i32 = arith.constant 0 : i32
    %c0_i32_0 = arith.constant 0 : i32
    %c0_i32_1 = arith.constant 0 : i32
    return %c0_i32, %c0_i32_0 : i32, i32
  }
  func.func @transform_7(%arg0: i32) -> (i32, i32) {
    %c0_i32 = arith.constant 0 : i32
    %c0_i32_0 = arith.constant 0 : i32
    return %arg0, %c0_i32 : i32, i32
  }
}

</mosaic_0001>

<llo_original>
// kernel: _time_encoder_jit.1
$region0: #{_time_encoder_jit.1}
  #allocation0 [shape = 'u32[]', space=smem, size = 0x4, offset = 0x4, fixed_abs, tag = 'smem constant byte address 0x4 - core index']
  #allocation1 [shape = 'u32[72,128]{1,0:T(1,128)}', space=vmem, size = 0x9000, scoped, tag = 'internal scratch']
  %s0 = inlined_call_operand.vmem [shape: f32[2,8], index: 0, kind: input, shape index: {}]
  %s1 = inlined_call_operand.hbm [shape: f32[2,8,64], index: 1, kind: input, shape index: {}]
  %s2 = inlined_call_operand.vmem [shape: s8[2,8], index: 2, kind: input, shape index: {}]
  %s3 = inlined_call_operand.hbm [shape: f32[1,64], index: 3, kind: input, shape index: {}]
  %s4 = inlined_call_operand.hbm [shape: f32[1,64], index: 4, kind: input, shape index: {}]
  %s5 = inlined_call_operand.hbm [shape: f32[64,64], index: 5, kind: input, shape index: {}]
  %s6 = inlined_call_operand.hbm [shape: f32[1,64], index: 6, kind: input, shape index: {}]
  %s7 = inlined_call_operand.hbm [shape: f32[2,8], index: 7, kind: output, shape index: {}]
  %s8 = sld [smem:[#allocation0]]
  $region58: #{_time_encoder_jit.1} parent=0
    _
  %s10 = ssub.s32 1, %s8
  %s11 = scalar_select 0, %s10, %s8
  $region1: #{_time_encoder_jit.1} parent=0
    #allocation2 [shape = 'u8[8192]{0}', space=vmem, size = 0x2000, scoped, tag = 'input window, operand 1, single buffered']
    #allocation3 [shape = 's32[1]{0}', space=sflag, size = 0x4, scoped, tag = 'scoped memory for _time_encoder_jit.1']
    #allocation4 [shape = 's32[1]{0}', space=sflag, size = 0x4, scoped, tag = 'scoped memory for _time_encoder_jit.1']
    #allocation5 [shape = 'u8[512]{0}', space=vmem, size = 0x400, scoped, tag = 'input window, operand 3, single buffered']
    #allocation6 [shape = 's32[1]{0}', space=sflag, size = 0x4, scoped, tag = 'scoped memory for _time_encoder_jit.1']
    #allocation7 [shape = 'u8[512]{0}', space=vmem, size = 0x400, scoped, tag = 'input window, operand 4, single buffered']
    #allocation8 [shape = 'u8[32768]{0}', space=vmem, size = 0x8000, scoped, tag = 'input window, operand 5, single buffered']
    #allocation9 [shape = 's32[1]{0}', space=sflag, size = 0x4, scoped, tag = 'scoped memory for _time_encoder_jit.1']
    #allocation10 [shape = 'u8[512]{0}', space=vmem, size = 0x400, scoped, tag = 'input window, operand 6, single buffered']
    #allocation11 [shape = 'u8[1024]{0}', space=vmem, size = 0x400, scoped, tag = 'output window, operand 0, single buffered']
    %12 = vsyncpa [#allocation3], 0
    %13 = vsyncpa [#allocation6], 0
    %14 = vsyncpa [#allocation9], 0
    %15 = vsyncpa [#allocation4], 0
    // Predicated region
    $region2: #{_time_encoder_jit.1} parent=1 // pred_check
      _
    $region3: #{_time_encoder_jit.1} parent=1 // pred_check_branch
      %17 = sbr.rel (0) target = $region5
    $region4: #{_time_encoder_jit.1} parent=1 // pred_region
      _
    $region5: #{_time_encoder_jit.1} parent=1 // pred_fallthru
      _
    // Predicated region
    $region6: #{_time_encoder_jit.1} parent=1 // pred_check
      _
    $region7: #{_time_encoder_jit.1} parent=1 // pred_check_branch
      %19 = sbr.rel (0) target = $region9
    $region8: #{_time_encoder_jit.1} parent=1 // pred_region
      %21 = vsyncadd [#allocation3], 0
      %s22 = sshll.u32 %s1, 4
      %s23 = int_to_ptr.hbm [resolvable:$true] %s22
      %s24 = sshll.u32 [#allocation2], 4
      %s25 = int_to_ptr.vmem [resolvable:$true] %s24
      %30 = dma.hbm_to_vmem [thread:$0]  %s23, 256, %s25, [#allocation3], 128, 128, 8
    $region9: #{_time_encoder_jit.1} parent=1 // pred_fallthru
      _
    // Predicated region
    $region10: #{_time_encoder_jit.1} parent=1 // pred_check
      _
    $region11: #{_time_encoder_jit.1} parent=1 // pred_check_branch
      %32 = sbr.rel (0) target = $region13
    $region12: #{_time_encoder_jit.1} parent=1 // pred_region
      _
    $region13: #{_time_encoder_jit.1} parent=1 // pred_fallthru
      _
    // Predicated region
    $region14: #{_time_encoder_jit.1} parent=1 // pred_check
      _
    $region15: #{_time_encoder_jit.1} parent=1 // pred_check_branch
      %34 = sbr.rel (0) target = $region17
    $region16: #{_time_encoder_jit.1} parent=1 // pred_region
      %36 = vsyncadd [#allocation6], 0
      %s38 = sshll.u32 %s3, 4
      %s39 = int_to_ptr.hbm [resolvable:$true] %s38
      %s40 = sshll.u32 [#allocation5], 4
      %s41 = int_to_ptr.vmem [resolvable:$true] %s40
      %43 = dma.hbm_to_vmem [thread:$0]  %s39, 16, %s41, [#allocation6]
    $region17: #{_time_encoder_jit.1} parent=1 // pred_fallthru
      _
    // Predicated region
    $region18: #{_time_encoder_jit.1} parent=1 // pred_check
      _
    $region19: #{_time_encoder_jit.1} parent=1 // pred_check_branch
      %45 = sbr.rel (0) target = $region21
    $region20: #{_time_encoder_jit.1} parent=1 // pred_region
      %47 = vsyncadd [#allocation6], 0
      %s49 = sshll.u32 %s4, 4
      %s50 = int_to_ptr.hbm [resolvable:$true] %s49
      %s51 = sshll.u32 [#allocation7], 4
      %s52 = int_to_ptr.vmem [resolvable:$true] %s51
      %54 = dma.hbm_to_vmem [thread:$0]  %s50, 16, %s52, [#allocation6]
    $region21: #{_time_encoder_jit.1} parent=1 // pred_fallthru
      _
    // Predicated region
    $region22: #{_time_encoder_jit.1} parent=1 // pred_check
      _
    $region23: #{_time_encoder_jit.1} parent=1 // pred_check_branch
      %56 = sbr.rel (0) target = $region25
    $region24: #{_time_encoder_jit.1} parent=1 // pred_region
      %58 = vsyncadd [#allocation9], 0
      %s59 = sshll.u32 %s5, 4
      %s60 = int_to_ptr.hbm [resolvable:$true] %s59
      %s61 = sshll.u32 [#allocation8], 4
      %s62 = int_to_ptr.vmem [resolvable:$true] %s61
      %67 = dma.hbm_to_vmem [thread:$0]  %s60, 1024, %s62, [#allocation9], 128, 128, 8
    $region25: #{_time_encoder_jit.1} parent=1 // pred_fallthru
      _
    // Predicated region
    $region26: #{_time_encoder_jit.1} parent=1 // pred_check
      _
    $region27: #{_time_encoder_jit.1} parent=1 // pred_check_branch
      %69 = sbr.rel (0) target = $region29
    $region28: #{_time_encoder_jit.1} parent=1 // pred_region
      %71 = vsyncadd [#allocation9], 0
      %s73 = sshll.u32 %s6, 4
      %s74 = int_to_ptr.hbm [resolvable:$true] %s73
      %s75 = sshll.u32 [#allocation10], 4
      %s76 = int_to_ptr.vmem [resolvable:$true] %s75
      %78 = dma.hbm_to_vmem [thread:$0]  %s74, 16, %s76, [#allocation9]
    $region29: #{_time_encoder_jit.1} parent=1 // pred_fallthru
      _
    // Predicated region
    $region30: #{_time_encoder_jit.1} parent=1 // pred_check
      _
    $region31: #{_time_encoder_jit.1} parent=1 // pred_check_branch
      %80 = sbr.rel (0) target = $region33
    $region32: #{_time_encoder_jit.1} parent=1 // pred_region
      %82 = dma.done [#allocation3], 256
    $region33: #{_time_encoder_jit.1} parent=1 // pred_fallthru
      _
    // Predicated region
    $region34: #{_time_encoder_jit.1} parent=1 // pred_check
      _
    $region35: #{_time_encoder_jit.1} parent=1 // pred_check_branch
      %84 = sbr.rel (0) target = $region37
    $region36: #{_time_encoder_jit.1} parent=1 // pred_region
      %86 = dma.done [#allocation6], 16
    $region37: #{_time_encoder_jit.1} parent=1 // pred_fallthru
      _
    // Predicated region
    $region38: #{_time_encoder_jit.1} parent=1 // pred_check
      _
    $region39: #{_time_encoder_jit.1} parent=1 // pred_check_branch
      %88 = sbr.rel (0) target = $region41
    $region40: #{_time_encoder_jit.1} parent=1 // pred_region
      %90 = dma.done [#allocation6], 16
    $region41: #{_time_encoder_jit.1} parent=1 // pred_fallthru
      _
    // Predicated region
    $region42: #{_time_encoder_jit.1} parent=1 // pred_check
      _
    $region43: #{_time_encoder_jit.1} parent=1 // pred_check_branch
      %92 = sbr.rel (0) target = $region45
    $region44: #{_time_encoder_jit.1} parent=1 // pred_region
      %94 = dma.done [#allocation9], 1024
    $region45: #{_time_encoder_jit.1} parent=1 // pred_fallthru
      _
    // Predicated region
    $region46: #{_time_encoder_jit.1} parent=1 // pred_check
      _
    $region47: #{_time_encoder_jit.1} parent=1 // pred_check_branch
      %96 = sbr.rel (0) target = $region49
    $region48: #{_time_encoder_jit.1} parent=1 // pred_region
      %98 = dma.done [#allocation9], 16
    $region49: #{_time_encoder_jit.1} parent=1 // pred_fallthru
      _
    %v99 = vld [vmem:[%s0] sm:$0x3]
    %v100 = vmul.f32 %v99, 0.0055555557
    %v101 = vperm.slane %v100, 0
    %v102 = vlaneseq
    %v103 = vshrl.u32 %v102, 7
    %105 = vset.pattern.permute.xlu0 %v103
    %106 = vperm.xlu0 %105, %v101
    %v107 = vpop.permute.xlu0 %106
    %v108 = vperm.slane %v100, 1
    %v109 = vlaneseq
    %v110 = vshrl.u32 %v109, 7
    %112 = vset.pattern.permute.xlu0 %v110
    %113 = vperm.xlu0 %112, %v108
    %v114 = vpop.permute.xlu0 %113
    %v115 = vld [vmem:[#allocation5] sm:$0x1]
    %v117 = vperm.slane %v115, 0
    %v119 = vmul.f32 %v107, %v117
    %v120 = vmul.f32 %v114, %v117
    %v121 = vld [vmem:[#allocation7] sm:$0x1]
    %v123 = vperm.slane %v121, 0
    %v125 = vadd.f32 %v119, %v123
    %v126 = vadd.f32 %v120, %v123
    %v127 = vmul.f32 %v125, %v125
    %v128 = vmul.f32 %v126, %v126
    %v129 = vtanh.pop %v127
    %v130 = vtanh.pop %v128
    %v131 = vsub.f32 1.0, %v129
    %v132 = vsub.f32 1.0, %v130
    %v133 = vld [vmem:[#allocation8] sm:$0xff]
    %v134 = vld [vmem:[#allocation8 + $0x8] sm:$0xff]
    %v135 = vld [vmem:[#allocation8 + $0x10] sm:$0xff]
    %v136 = vld [vmem:[#allocation8 + $0x18] sm:$0xff]
    %v137 = vld [vmem:[#allocation8 + $0x20] sm:$0xff]
    %v138 = vld [vmem:[#allocation8 + $0x28] sm:$0xff]
    %v139 = vld [vmem:[#allocation8 + $0x30] sm:$0xff]
    %v140 = vld [vmem:[#allocation8 + $0x38] sm:$0xff]
    %v141 = vld [vmem:[#allocation10] sm:$0x1]
    %v143 = vperm.slane %v141, 0
    %vm145 = vcmask 523264
    %v147 = vsel %vm145, %v131, 0
    %v150 = vsel %vm145, %v132, 0
    %152 = vmatpush.msra.mxu0 0.0
    %153 = vmatpush.msra.mxu0 0.0
    %154 = vmatpush.msra.mxu0 0.0
    %155 = vmatpush.msra.mxu0 0.0
    %156 = vmatpush.msra.mxu0 0.0
    %157 = vmatpush.msra.mxu0 0.0
    %158 = vmatpush.msra.mxu0 0.0
    %159 = vmatpush.msra.mxu0 0.0
    %160 = vmatpush.msra.mxu0 %v140
    %161 = vmatpush.msra.mxu0 %v139
    %162 = vmatpush.msra.mxu0 %v138
    %163 = vmatpush.msra.mxu0 %v137
    %164 = vmatpush.msra.mxu0 %v136
    %165 = vmatpush.msra.mxu0 %v135
    %166 = vmatpush.msra.mxu0 %v134
    %167 = vmatpush.msra.mxu0 %v133
    %168 = vmatmul.f32.gmra.mxu0 %v147
    %v169 = vpop.f32.mrf.mxu0
    %v170 = vadd.f32 %v143, %v169
    %171 = vmatmul.f32.gmra.mxu0 %v150
    %v172 = vpop.f32.mrf.mxu0
    %v173 = vadd.f32 %v143, %v172
    %174 = vdwg.mxu0
    %v175 = vmax.f32 %v170, 0.0
    %v176 = vmax.f32 %v173, 0.0
    %v177 = vld [vmem:[#allocation2] sm:$0xff]
    %v178 = vld [vmem:[#allocation2 + $0x8] sm:$0xff]
    %v179 = vmul.f32 %v175, %v177
    %v180 = vmul.f32 %v176, %v178
    %v181 = vsel %vm145, %v179, 0.0
    %182 = vadd.xlane.f32.xlu0 %v181
    %v183 = vpop.xlane.xlu0 %182
    %v184 = vsel %vm145, %v180, 0.0
    %185 = vadd.xlane.f32.xlu0 %v184
    %v186 = vpop.xlane.xlu0 %185
    %v187 = vmul.f32 %v183, 0.125
    %v188 = vmul.f32 %v186, 0.125
    %v189 = vld [vmem:[%s2] sm:$0x1]
    %v190 = vunpack.c.0.s8 %v189
    %v191 = vcvt.s32.f32 %v190
    %vm192 = vcmp.ne.f32.partialorder %v191, 0.0
    %v196 = vunpack.c.l.s4 839922192
    %v197 = vunpack.c.0.s8 %v196
    %v198 = vperm.slane %v187, %v197
    %v200 = vunpack.c.l.s4 1985246804
    %v201 = vunpack.c.0.s8 %v200
    %v202 = vperm.slane %v187, %v201
    %v204 = vunpack.c.l.s4 839922192
    %v205 = vunpack.c.0.s8 %v204
    %v206 = vperm.slane %v188, %v205
    %v208 = vunpack.c.l.s4 1985246804
    %v209 = vunpack.c.0.s8 %v208
    %v210 = vperm.slane %v188, %v209
    %211 = vst [vmem:[#allocation1] ss:$2 sm:$0xff] %v198
    %s212 = scalar_lea.vmem [#allocation1], 1
    %213 = vst [vmem:[%s212] ss:$2 sm:$0xff] %v202
    %v214 = vld.sshfl [vmem:[#allocation1] sm:$0xff pattern:$0x75316420]
    %s215 = scalar_lea.vmem [#allocation1], 16
    %216 = vst [vmem:[%s215] ss:$2 sm:$0xff] %v206
    %s217 = scalar_lea.vmem [#allocation1], 17
    %218 = vst [vmem:[%s217] ss:$2 sm:$0xff] %v210
    %v219 = vld.sshfl [vmem:[#allocation1 + $0x10] sm:$0xff pattern:$0x75316420]
    %220 = vset.pattern.permute.xlu0 0
    %221 = vperm.xlu0 %220, %v214
    %v222 = vpop.permute.xlu0 %221
    %223 = vset.pattern.permute.xlu0 0
    %224 = vperm.xlu0 %223, %v219
    %v225 = vpop.permute.xlu0 %224
    %v226 = vlaneseq
    %v227 = vand.u32 %v226, 127
    %v228 = vperm.slane %v222, %v227
    %v229 = vperm.slane %v225, %v227
    %vm230 = vcmask 1041409
    %v231 = vsel %vm230, %v229, %v228
    %v233 = vsel %vm192, -1e+30, %v231
    %vm234 = vcmask 58368
    %v235 = vsel %vm234, %v233, -inf
    %236 = vmax.xlane.f32.xlu0 %v235
    %v237 = vpop.xlane.xlu0 %236
    %v238 = vsub.f32 %v233, %v237
    %v239 = vmul.f32 %v238, 1.442695
    %v240 = vpow.pop %v239
    %v241 = vsel %vm234, %v240, 0.0
    %242 = vadd.xlane.f32.xlu0 %v241
    %v243 = vpop.xlane.xlu0 %242
    %v244 = vrcp.pop %v243
    %v245 = vmul.f32 %v243, %v244
    %v246 = vsub.f32 1.0, %v245
    %v247 = vmul.f32 %v244, %v246
    %v248 = vadd.f32 %v244, %v247
    %vm249 = vweird.f32 %v243
    %vm250 = vweird.f32 %v244
    %vm251 = vmor %vm249, %vm250
    %v252 = vsel %vm251, %v244, %v248
    %v253 = vand.u32 2147483647, %v243
    %vm254 = vcmp.eq.f32.partialorder %v253, 8.507059e+37
    %v255 = vand.u32 %v243, 2147483648
    %v256 = vor.u32 1.1754944e-38, %v255
    %v257 = vsel %vm254, %v256, %v252
    %v258 = vmul.f32 %v240, %v257
    %259 = vst.msk [vmem:[#allocation11] sm:$0x3] %vm234, %v258
    // Predicated region
    $region50: #{_time_encoder_jit.1} parent=1 // pred_check
      _
    $region51: #{_time_encoder_jit.1} parent=1 // pred_check_branch
      %261 = sbr.rel (0) target = $region53
    $region52: #{_time_encoder_jit.1} parent=1 // pred_region
      %263 = vsyncadd [#allocation4], 0
      %s265 = sshll.u32 [#allocation11], 4
      %s266 = int_to_ptr.vmem [resolvable:$true] %s265
      %s267 = sshll.u32 %s7, 4
      %s268 = int_to_ptr.hbm [resolvable:$true] %s267
      %270 = dma.vmem_to_hbm [thread:$0]  %s266, 32, %s268, [#allocation4]
    $region53: #{_time_encoder_jit.1} parent=1 // pred_fallthru
      _
    // Predicated region
    $region54: #{_time_encoder_jit.1} parent=1 // pred_check
      _
    $region55: #{_time_encoder_jit.1} parent=1 // pred_check_branch
      %272 = sbr.rel (0) target = $region57
    $region56: #{_time_encoder_jit.1} parent=1 // pred_region
      %274 = dma.done [#allocation4], 32
    $region57: #{_time_encoder_jit.1} parent=1 // pred_fallthru
      _
    %275 = vsyncpa [#allocation3], 1
    %276 = vsyncpa [#allocation6], 1
    %277 = vsyncpa [#allocation9], 1
    %278 = vsyncpa [#allocation4], 1

</llo_original>
